<compile_context>
chip_gen: v5e
topology: v5e:2x2
jax: 0.10.0
libtpu: 0.0.40
codegen_flags: <defaults>
</compile_context>

<pallas_src>
import functools

import jax
import jax.numpy as jnp
from jax.experimental import pallas as pl
from jax.experimental.pallas import tpu as pltpu


# ----------------------------------------------------------------------------
# Pure-XLA exact relayout (reference + fallback path).
# ----------------------------------------------------------------------------
def _pixel_unshuffle_xla(put, r):
    B, C, H, W = put.shape
    Ho, Wo = H // r, W // r
    t = put.reshape(B, C, Ho, r, Wo, r)
    t = jnp.transpose(t, (0, 1, 3, 5, 2, 4))
    return t.reshape(B, C * r * r, Ho, Wo)


# ----------------------------------------------------------------------------
# Pallas kernel.
# ----------------------------------------------------------------------------
def _pixel_unshuffle_kernel(x_ref, p_ref, o_ref, *, r, H, W, bct):
    """x_ref: (bct*H, W)  -- bct channel planes stacked on the row axis.
       p_ref: (W, W)      -- VMEM-resident permutation matrix, P[j*r+x, x*Wo+j]=1.
       o_ref: (bct, r*r, Ho, Wo)."""
    Ho, Wo = H // r, W // r
    perm = p_ref[...]                                       # resident, read once

    for y in range(r):
        # Sublane-strided load: rows i*r + y of every plane in this block.
        # Merged row index m = bc_local*Ho + i  (since H = Ho*r).
        rows = x_ref[pl.ds(y, bct * Ho, stride=r), :]        # (bct*Ho, W)
        # One fused permutation matmul per y on the MXU (exact: one 1.0/column).
        res = jnp.dot(rows, perm,
                      preferred_element_type=jnp.float32)    # (bct*Ho, W)
        res = res.astype(o_ref.dtype)
        for x in range(r):
            sub = res[:, x * Wo:(x + 1) * Wo]                # static column peel
            o_ref[:, y * r + x, :, :] = sub.reshape(bct, Ho, Wo)


# ----------------------------------------------------------------------------
# Wrapper-side helpers.
# ----------------------------------------------------------------------------
def _perm_matrix(W, r, dtype):
    """(W, W) matrix with P[w, x*Wo + j] = 1 iff w == j*r + x."""
    Wo = W // r
    col = jnp.arange(W)
    src = (col % Wo) * r + (col // Wo)                       # w pulled by column
    return (jnp.arange(W)[:, None] == src[None, :]).astype(dtype)


def _vmem_limit_bytes():
    """Scoped-VMEM limit: ~half of physical, capped at 64 MiB, >= 32 MiB."""
    default = 32 * 1024 * 1024
    try:
        cap = int(getattr(pltpu.get_tpu_info(), "vmem_capacity_bytes", 0) or 0)
    except Exception:
        return default
    if cap <= 0:
        return default
    return max(default, min(64 * 1024 * 1024, cap // 2))


def _choose_bct(BC, H, W, r, itemsize, payload_budget):
    """Planes per grid step.

    Largest divisor of B*C whose (in + out) single-buffer payload fits the
    budget (double-buffering / f32 intermediates / perm matrix are covered by
    the budget's headroom), keeps the input block 8-aligned on the second-minor
    dim, and prefers an EVEN number of grid steps >= 2 for megacore balance.
    Returns None if nothing fits (caller falls back to pure XLA).
    """
    Ho = H // r
    bytes_per_plane = 2 * H * W * itemsize                   # in + out payload
    divisors = [d for d in range(1, BC + 1) if BC % d == 0]
    fits = [d for d in divisors
            if ((d * H) % 8 == 0 or d == BC)
            and d * bytes_per_plane <= payload_budget]
    if not fits:
        return None
    if Ho % 8 != 0 and 1 in fits and BC > 1:
        # Keep the per-(y,x) store reshape a trivial leading-dim expand so it
        # does not trigger a sublane-splitting relayout copy.
        return 1
    even = [d for d in fits if (BC // d) >= 2 and (BC // d) % 2 == 0]
    multi = [d for d in fits if (BC // d) >= 2]
    pool = even or multi or fits
    return max(pool)


# ----------------------------------------------------------------------------
# Public entry point (matches Pixel_Unshuffle.forward(put, down_scale)).
# ----------------------------------------------------------------------------
def pixel_unshuffle(put, down_scale):
    """put: (B, C, H, W) -> (B, C*r*r, H//r, W//r), matching the PyTorch module."""
    B, C, H, W = put.shape
    r = int(down_scale)
    if r == 1:
        return put

    Ho, Wo = H // r, W // r
    if Ho == 0 or Wo == 0:
        return _pixel_unshuffle_xla(put[:, :, :Ho * r, :Wo * r], r)
    if H % r or W % r:
        # F.conv2d with stride=r silently drops the trailing H%r / W%r rows/cols.
        put = put[:, :, :Ho * r, :Wo * r]
        H, W = Ho * r, Wo * r

    itemsize = put.dtype.itemsize
    limit = _vmem_limit_bytes()

    # Fallback cases: non-float (no MXU int path on v7x), or W so wide that the
    # (W, W) permutation matrix / W^2 matmul flops would dominate this
    # otherwise memory-bound relayout.
    if (not jnp.issubdtype(put.dtype, jnp.floating)
            or W * W * itemsize > limit // 8):
        return _pixel_unshuffle_xla(put, r)

    BC = B * C
    bct = _choose_bct(BC, H, W, r, itemsize, limit // 6)
    if bct is None:
        return _pixel_unshuffle_xla(put, r)

    grid = (BC // bct,)

    # Free (row-major) reshape: stack all channel planes on the row axis so one
    # grid step DMAs a large contiguous slab.
    x2d = put.reshape(BC * H, W)
    perm = _perm_matrix(W, r, put.dtype)

    out = pl.pallas_call(
        functools.partial(_pixel_unshuffle_kernel, r=r, H=H, W=W, bct=bct),
        out_shape=jax.ShapeDtypeStruct((BC, r * r, Ho, Wo), put.dtype),
        grid_spec=pltpu.PrefetchScalarGridSpec(
            num_scalar_prefetch=0,
            grid=grid,
            in_specs=[
                pl.BlockSpec((bct * H, W), lambda g: (g, 0)),
                # Constant block index -> permutation matrix stays VMEM-resident.
                pl.BlockSpec((W, W), lambda g: (0, 0)),
            ],
            out_specs=pl.BlockSpec((bct, r * r, Ho, Wo),
                                   lambda g: (g, 0, 0, 0)),
        ),
        compiler_params=pltpu.CompilerParams(
            dimension_semantics=("parallel",),     # shard grid over TCs on v7x
            vmem_limit_bytes=limit,
        ),
        cost_estimate=pl.CostEstimate(
            flops=2 * BC * H * W * W,
            transcendentals=0,
            bytes_accessed=2 * put.size * itemsize + W * W * itemsize,
        ),
    )(x2d, perm)

    # Free reshape back: (B*C, r*r, Ho, Wo) -> (B, C*r*r, Ho, Wo) gives exactly
    # the torch channel order c*r*r + y*r + x.
    return out.reshape(B, C * r * r, Ho, Wo)


# ----------------------------------------------------------------------------
# Self-test.
# ----------------------------------------------------------------------------
if __name__ == "__main__":
    key = jax.random.PRNGKey(0)
    k1, k2, k3 = jax.random.split(key, 3)

    # Main case (f32, r=2) -- exercises bct=4, grid=(2,).
    B, C, H, W, r = 2, 4, 16, 16, 2
    put = jax.random.normal(k1, (B, C, H, W), dtype=jnp.float32)
    out = pixel_unshuffle(put, r)
    jax.block_until_ready(out)
    ref = _pixel_unshuffle_xla(put, r)
    assert out.shape == (B, C * r * r, H // r, W // r)
    assert jnp.allclose(out, ref, atol=1e-6, rtol=1e-6), "f32 r=2 mismatch"

    # Larger down_scale (f32, r=4) -- exercises bct=1, fused (32,32) perm matmul.
    B2, C2, H2, W2, r2 = 1, 2, 32, 32, 4
    put2 = jax.random.normal(k2, (B2, C2, H2, W2), dtype=jnp.float32)
    out2 = pixel_unshuffle(put2, r2)
    jax.block_until_ready(out2)
    ref2 = _pixel_unshuffle_xla(put2, r2)
    assert out2.shape == (B2, C2 * r2 * r2, H2 // r2, W2 // r2)
    assert jnp.allclose(out2, ref2, atol=1e-6, rtol=1e-6), "f32 r=4 mismatch"

    # bf16 case (no f32 promotion inside the kernel).
    B3, C3, H3, W3, r3 = 2, 2, 16, 16, 2
    put3 = jax.random.normal(k3, (B3, C3, H3, W3), dtype=jnp.bfloat16)
    out3 = pixel_unshuffle(put3, r3)
    jax.block_until_ready(out3)
    ref3 = _pixel_unshuffle_xla(put3, r3)
    assert out3.shape == (B3, C3 * r3 * r3, H3 // r3, W3 // r3)
    assert jnp.allclose(out3.astype(jnp.float32), ref3.astype(jnp.float32),
                        atol=1e-2, rtol=1e-2), "bf16 r=2 mismatch"

    print("KERNEL_OK")
</pallas_src>

<mosaic_0001>
module attributes {stable_mosaic.version = 11 : i64} {
  func.func @_pixel_unshuffle_kernel(%arg0: i32, %arg1: memref<64x16xf32, #tpu.memory_space<vmem>>, %arg2: memref<16x16xf32, #tpu.memory_space<vmem>>, %arg3: memref<4x4x8x8xf32, #tpu.memory_space<vmem>>) attributes {dimension_semantics = [#tpu.dimension_semantics<parallel>], iteration_bounds = array<i64: 2>, scalar_prefetch = 0 : i64, scratch_operands = 0 : i64, tpu.core_type = #tpu.core_type<tc>, window_params = [{transform_indices = @transform_0, window_bounds = array<i64: 64, 16>}, {pipeline_mode = #tpu.pipeline_mode<synchronous>, transform_indices = @transform_1, window_bounds = array<i64: 16, 16>}, {transform_indices = @transform_2, window_bounds = array<i64: 4, 4, 8, 8>}]} {
    %c0 = arith.constant 0 : index
    %c0_0 = arith.constant 0 : index
    %0 = vector.load %arg2[%c0, %c0_0] : memref<16x16xf32, #tpu.memory_space<vmem>>, vector<16x16xf32>
    %c0_1 = arith.constant 0 : index
    %c0_2 = arith.constant 0 : index
    %1 = tpu.strided_load %arg1[%c0_1, %c0_2] {strides = array<i32: 2, 1>} : memref<64x16xf32, #tpu.memory_space<vmem>>, vector<32x16xf32>
    %cst = arith.constant dense<0.000000e+00> : vector<32x16xf32>
    %2 = tpu.matmul %1, %0, %cst {dimension_numbers = #tpu.dot_dimension_numbers<[1], [0], [0], [1], [0, 0, 1, 1], [], []>} : vector<32x16xf32>, vector<16x16xf32>, vector<32x16xf32> -> vector<32x16xf32>
    %3 = vector.extract_strided_slice %2 {offsets = [0, 0], sizes = [32, 8], strides = [1, 1]} : vector<32x16xf32> to vector<32x8xf32>
    %4 = vector.shape_cast %3 : vector<32x8xf32> to vector<4x8x8xf32>
    %c0_3 = arith.constant 0 : index
    %c0_4 = arith.constant 0 : index
    %c0_5 = arith.constant 0 : index
    %c0_6 = arith.constant 0 : index
    %5 = vector.load %arg3[%c0_3, %c0_4, %c0_5, %c0_6] : memref<4x4x8x8xf32, #tpu.memory_space<vmem>>, vector<4x1x8x8xf32>
    %6 = vector.shape_cast %5 : vector<4x1x8x8xf32> to vector<4x8x8xf32>
    %7 = vector.shape_cast %4 : vector<4x8x8xf32> to vector<4x1x8x8xf32>
    tpu.vector_store %arg3[%c0_3, %c0_4, %c0_5, %c0_6], %7 {strides = array<i32>} : memref<4x4x8x8xf32, #tpu.memory_space<vmem>>, vector<4x1x8x8xf32>,
    %8 = vector.extract_strided_slice %2 {offsets = [0, 8], sizes = [32, 8], strides = [1, 1]} : vector<32x16xf32> to vector<32x8xf32>
    %9 = vector.shape_cast %8 : vector<32x8xf32> to vector<4x8x8xf32>
    %c0_7 = arith.constant 0 : index
    %c1 = arith.constant 1 : index
    %c0_8 = arith.constant 0 : index
    %c0_9 = arith.constant 0 : index
    %10 = vector.load %arg3[%c0_7, %c1, %c0_8, %c0_9] : memref<4x4x8x8xf32, #tpu.memory_space<vmem>>, vector<4x1x8x8xf32>
    %11 = vector.shape_cast %10 : vector<4x1x8x8xf32> to vector<4x8x8xf32>
    %12 = vector.shape_cast %9 : vector<4x8x8xf32> to vector<4x1x8x8xf32>
    tpu.vector_store %arg3[%c0_7, %c1, %c0_8, %c0_9], %12 {strides = array<i32>} : memref<4x4x8x8xf32, #tpu.memory_space<vmem>>, vector<4x1x8x8xf32>,
    %c1_10 = arith.constant 1 : index
    %c0_11 = arith.constant 0 : index
    %13 = tpu.strided_load %arg1[%c1_10, %c0_11] {strides = array<i32: 2, 1>} : memref<64x16xf32, #tpu.memory_space<vmem>>, vector<32x16xf32>
    %cst_12 = arith.constant dense<0.000000e+00> : vector<32x16xf32>
    %14 = tpu.matmul %13, %0, %cst_12 {dimension_numbers = #tpu.dot_dimension_numbers<[1], [0], [0], [1], [0, 0, 1, 1], [], []>} : vector<32x16xf32>, vector<16x16xf32>, vector<32x16xf32> -> vector<32x16xf32>
    %15 = vector.extract_strided_slice %14 {offsets = [0, 0], sizes = [32, 8], strides = [1, 1]} : vector<32x16xf32> to vector<32x8xf32>
    %16 = vector.shape_cast %15 : vector<32x8xf32> to vector<4x8x8xf32>
    %c0_13 = arith.constant 0 : index
    %c2 = arith.constant 2 : index
    %c0_14 = arith.constant 0 : index
    %c0_15 = arith.constant 0 : index
    %17 = vector.load %arg3[%c0_13, %c2, %c0_14, %c0_15] : memref<4x4x8x8xf32, #tpu.memory_space<vmem>>, vector<4x1x8x8xf32>
    %18 = vector.shape_cast %17 : vector<4x1x8x8xf32> to vector<4x8x8xf32>
    %19 = vector.shape_cast %16 : vector<4x8x8xf32> to vector<4x1x8x8xf32>
    tpu.vector_store %arg3[%c0_13, %c2, %c0_14, %c0_15], %19 {strides = array<i32>} : memref<4x4x8x8xf32, #tpu.memory_space<vmem>>, vector<4x1x8x8xf32>,
    %20 = vector.extract_strided_slice %14 {offsets = [0, 8], sizes = [32, 8], strides = [1, 1]} : vector<32x16xf32> to vector<32x8xf32>
    %21 = vector.shape_cast %20 : vector<32x8xf32> to vector<4x8x8xf32>
    %c0_16 = arith.constant 0 : index
    %c3 = arith.constant 3 : index
    %c0_17 = arith.constant 0 : index
    %c0_18 = arith.constant 0 : index
    %22 = vector.load %arg3[%c0_16, %c3, %c0_17, %c0_18] : memref<4x4x8x8xf32, #tpu.memory_space<vmem>>, vector<4x1x8x8xf32>
    %23 = vector.shape_cast %22 : vector<4x1x8x8xf32> to vector<4x8x8xf32>
    %24 = vector.shape_cast %21 : vector<4x8x8xf32> to vector<4x1x8x8xf32>
    tpu.vector_store %arg3[%c0_16, %c3, %c0_17, %c0_18], %24 {strides = array<i32>} : memref<4x4x8x8xf32, #tpu.memory_space<vmem>>, vector<4x1x8x8xf32>,
    return
  }
  func.func @transform_0(%arg0: i32) -> (i32, i32) {
    %c0_i32 = arith.constant 0 : i32
    %c0_i32_0 = arith.constant 0 : i32
    return %arg0, %c0_i32 : i32, i32
  }
  func.func @transform_1(%arg0: i32) -> (i32, i32) {
    %c0_i32 = arith.constant 0 : i32
    %c0_i32_0 = arith.constant 0 : i32
    %c0_i32_1 = arith.constant 0 : i32
    return %c0_i32, %c0_i32_0 : i32, i32
  }
  func.func @transform_2(%arg0: i32) -> (i32, i32, i32, i32) {
    %c0_i32 = arith.constant 0 : i32
    %c0_i32_0 = arith.constant 0 : i32
    %c0_i32_1 = arith.constant 0 : i32
    %c0_i32_2 = arith.constant 0 : i32
    return %arg0, %c0_i32, %c0_i32_0, %c0_i32_1 : i32, i32, i32, i32
  }
}

</mosaic_0001>

<llo_original>
// kernel: tpu_custom_call.1
$region0: #{tpu_custom_call.1}
  #allocation0 [shape = 'u32[]', space=smem, size = 0x4, offset = 0x4, fixed_abs, tag = 'smem constant byte address 0x4 - core index']
  #allocation1 [shape = 'u32[72,128]{1,0:T(1,128)}', space=vmem, size = 0x9000, scoped, tag = 'internal scratch']
  %s0 = inlined_call_operand.vmem [shape: f32[128,16], index: 0, kind: input, shape index: {}]
  %s1 = inlined_call_operand.vmem [shape: f32[16,16], index: 1, kind: input, shape index: {}]
  %s2 = inlined_call_operand.hbm [shape: f32[8,4,8,8], index: 2, kind: output, shape index: {}]
  %s3 = sld [smem:[#allocation0]]
  $region41: #{tpu_custom_call.1} parent=0
    _
  %s5 = ssub.s32 1, %s3
  %s6 = scalar_select 0, %s5, %s3
  $region1: #{tpu_custom_call.1} parent=0
    #allocation2 [shape = 'u8[131072]{0}', space=vmem, size = 0x20000, scoped, tag = 'output window, operand 0']
    #allocation3 [shape = 's32[2]{0}', space=sflag, size = 0x8, scoped, tag = 'scoped memory for tpu_custom_call.1']
    %7 = vsyncpa [#allocation3], 0
    %s8 = scalar_lea.sflag [#allocation3], 1
    %9 = vsyncpa %s8, 0
    loop: start=0, step=1, limit=4
    $region2: #{tpu_custom_call.1} parent=1 // loop_pre_header
      _
    $region3: #{tpu_custom_call.1} parent=1 // loop_header
      %s11 = sphi 0, %s15
      %p12 = scmp.ge.s32.totalorder %s11, 4
      %s21 = sphi 0, %s23
      %s24 = sphi 0, %s21
      %s25 = sphi 0, %s24
      %s41 = sphi 0, %s25
      %s45 = sphi 0, %s45
      %s47 = sphi 0, %s45
      %s48 = sphi 0, %s47
      %s62 = sphi 0, %s48
      %s68 = sphi 0, %s70
      %s71 = sphi 0, %s68
      %s72 = sphi 0, %s71
      %s88 = sphi 0, %s72
    $region4: #{tpu_custom_call.1} parent=1 // loop_header_branch
      %14 = sbr.rel (%p12) target = $region8
    $region5: #{tpu_custom_call.1} parent=1 // loop_body
      %s16 = ssub.s32 %s11, 1
      %s17 = ssub.s32 %s11, 2
      %s18 = sadd.s32 %s11, 1
      %s19 = ssub.s32 %s11, %s18
      %p20 = scmp.eq.s32.totalorder %s19, 0
      %s22 = sadd.s32 %s21, 1
      %s23 = scalar_select %p20, %s21, %s22
      %p26 = pneg %p20
      %p27 = scmp.eq.s32.totalorder %s11, 1
      %p28 = por %p26, %p27
      %p29 = scmp.ne.s32.totalorder %s21, %s24
      %p30 = scmp.eq.s32.totalorder %s11, 0
      %p31 = por %p29, %p30
      %p32 = scmp.ne.s32.totalorder %s21, %s24
      %p33 = scmp.eq.s32.totalorder %s16, 1
      %p34 = por %p32, %p33
      %p35 = scmp.ne.s32.totalorder %s24, %s25
      %p36 = scmp.eq.s32.totalorder %s16, 0
      %p37 = por %p35, %p36
      %p38 = scmp.ne.s32.totalorder %s24, %s25
      %p39 = scmp.eq.s32.totalorder %s17, 1
      %p40 = por %p38, %p39
      %p42 = scmp.ne.s32.totalorder %s25, %s41
      %p43 = scmp.eq.s32.totalorder %s17, 0
      %p44 = por %p42, %p43
      %s46 = sadd.s32 %s45, 1
      %p49 = scmp.eq.s32.totalorder %s11, 1
      %p50 = scmp.ne.s32.totalorder %s45, %s47
      %p51 = scmp.eq.s32.totalorder %s11, 0
      %p52 = por %p50, %p51
      %p53 = scmp.ne.s32.totalorder %s45, %s47
      %p54 = scmp.eq.s32.totalorder %s16, 1
      %p55 = por %p53, %p54
      %p56 = scmp.ne.s32.totalorder %s47, %s48
      %p57 = scmp.eq.s32.totalorder %s16, 0
      %p58 = por %p56, %p57
      %p59 = scmp.ne.s32.totalorder %s47, %s48
      %p60 = scmp.eq.s32.totalorder %s17, 1
      %p61 = por %p59, %p60
      %p63 = scmp.ne.s32.totalorder %s48, %s62
      %p64 = scmp.eq.s32.totalorder %s17, 0
      %p65 = por %p63, %p64
      %s66 = ssub.s32 %s11, %s18
      %p67 = scmp.eq.s32.totalorder %s66, 0
      %s69 = sadd.s32 %s68, 1
      %s70 = scalar_select %p67, %s68, %s69
      %p73 = pneg %p67
      %p74 = scmp.eq.s32.totalorder %s11, 1
      %p75 = por %p73, %p74
      %p76 = scmp.ne.s32.totalorder %s68, %s71
      %p77 = scmp.eq.s32.totalorder %s11, 0
      %p78 = por %p76, %p77
      %p79 = scmp.ne.s32.totalorder %s68, %s71
      %p80 = scmp.eq.s32.totalorder %s16, 1
      %p81 = por %p79, %p80
      %p82 = scmp.ne.s32.totalorder %s71, %s72
      %p83 = scmp.eq.s32.totalorder %s16, 0
      %p84 = por %p82, %p83
      %p85 = scmp.ne.s32.totalorder %s71, %s72
      %p86 = scmp.eq.s32.totalorder %s17, 1
      %p87 = por %p85, %p86
      %p89 = scmp.ne.s32.totalorder %s72, %s88
      %p90 = scmp.eq.s32.totalorder %s17, 0
      %p91 = por %p89, %p90
      %p92 = scmp.le.s32.totalorder 1, %s11
      %p93 = scmp.lt.s32.totalorder %s11, 3
      %p94 = pnand %p92, %p93
      %p95 = pneg %p94
      // Predicated region
      $region9: #{tpu_custom_call.1} parent=5 // pred_check
        _
      $region10: #{tpu_custom_call.1} parent=5 // pred_check_branch
        %97 = sbr.rel (%p94) target = $region12
      $region11: #{tpu_custom_call.1} parent=5 // pred_region
        %s98 = ssub.s32 %s11, 1
        // Predicated region
        $region13: #{tpu_custom_call.1} parent=11 // pred_check
          %p99 = pneg %p58
        $region14: #{tpu_custom_call.1} parent=11 // pred_check_branch
          %101 = sbr.rel (%p99) target = $region16
        $region15: #{tpu_custom_call.1} parent=11 // pred_region
          _
        $region16: #{tpu_custom_call.1} parent=11 // pred_fallthru
          _
      $region12: #{tpu_custom_call.1} parent=5 // pred_fallthru
        _
      %p102 = scmp.lt.s32.totalorder %s11, 2
      // Predicated region
      $region17: #{tpu_custom_call.1} parent=5 // pred_check
        %p103 = pneg %p102
      $region18: #{tpu_custom_call.1} parent=5 // pred_check_branch
        %105 = sbr.rel (%p103) target = $region20
      $region19: #{tpu_custom_call.1} parent=5 // pred_region
        // Predicated region
        $region21: #{tpu_custom_call.1} parent=19 // pred_check
          %p106 = pneg %p31
        $region22: #{tpu_custom_call.1} parent=19 // pred_check_branch
          %108 = sbr.rel (%p106) target = $region24
        $region23: #{tpu_custom_call.1} parent=19 // pred_region
          %s109 = smul.u32 8, %s11
          %p110 = scmp.lt.s32.totalorder %s109, 15
          %s111 = scalar_select %p110, %s109, 15
          %s112 = smul.addr %s111, 8
          %s113 = scalar_lea.vmem %s0, %s112
          %s114 = smul.u32 8, %s11
        $region24: #{tpu_custom_call.1} parent=19 // pred_fallthru
          _
      $region20: #{tpu_custom_call.1} parent=5 // pred_fallthru
        _
      %p115 = scmp.le.s32.totalorder 1, %s11
      %p116 = scmp.lt.s32.totalorder %s11, 3
      %p117 = pnand %p115, %p116
      %p118 = pneg %p117
      // Predicated region
      $region25: #{tpu_custom_call.1} parent=5 // pred_check
        _
      $region26: #{tpu_custom_call.1} parent=5 // pred_check_branch
        %120 = sbr.rel (%p117) target = $region28
      $region27: #{tpu_custom_call.1} parent=5 // pred_region
        %s121 = ssub.s32 %s11, 1
        %s122 = smul.u32 8, %s16
        %p123 = scmp.lt.s32.totalorder %s122, 15
        %s124 = scalar_select %p123, %s122, 15
        %s125 = smul.addr %s124, 8
        %s126 = scalar_lea.vmem %s0, %s125
        %p127 = pneg %p37
        %p128 = pneg %p34
        %p129 = pneg %p58
        %p130 = pneg %p55
        %p131 = pneg %p84
        %p132 = pneg %p81
        %s133 = sand.u32 %s71, 1
        %s134 = scalar_lea.sflag [#allocation3], %s133
        %s135 = sand.u32 %s71, 1
        %s136 = smul.addr %s135, 128
        %s137 = scalar_lea.vmem [#allocation2], %s136
        %s138 = smul.u32 8, %s16
        %p139 = scmp.lt.s32.totalorder %s138, 15
        %s140 = scalar_select %p139, %s138, 15
        %s141 = smul.addr %s140, 8
        %s142 = scalar_lea.vmem %s0, %s141
        %s143 = smul.u32 8, %s16
        %s144 = smul.u32 4, %s16
        %v145 = vld [vmem:[%s1] sm:$0xff]
        %v146 = vld [vmem:[%s1 + $0x8] sm:$0xff]
        %v147 = vld [vmem:[%s142] ss:$2 sm:$0xff]
        %s148 = scalar_lea.vmem %s142, 16
        %v149 = vld [vmem:[%s148] ss:$2 sm:$0xff]
        %s150 = scalar_lea.vmem %s142, 32
        %v151 = vld [vmem:[%s150] ss:$2 sm:$0xff]
        %s152 = scalar_lea.vmem %s142, 48
        %v153 = vld [vmem:[%s152] ss:$2 sm:$0xff]
        %vm154 = vcmask 130048
        %v156 = vsel %vm154, %v147, 0
        %v159 = vsel %vm154, %v149, 0
        %v162 = vsel %vm154, %v151, 0
        %v165 = vsel %vm154, %v153, 0
        %167 = vmatpush.msra.mxu0 0.0
        %168 = vmatpush.msra.mxu0 0.0
        %169 = vmatpush.msra.mxu0 0.0
        %170 = vmatpush.msra.mxu0 0.0
        %171 = vmatpush.msra.mxu0 0.0
        %172 = vmatpush.msra.mxu0 0.0
        %173 = vmatpush.msra.mxu0 0.0
        %174 = vmatpush.msra.mxu0 0.0
        %175 = vmatpush.msra.mxu0 0.0
        %176 = vmatpush.msra.mxu0 0.0
        %177 = vmatpush.msra.mxu0 0.0
        %178 = vmatpush.msra.mxu0 0.0
        %179 = vmatpush.msra.mxu0 0.0
        %180 = vmatpush.msra.mxu0 0.0
        %181 = vmatpush.msra.mxu0 %v146
        %182 = vmatpush.msra.mxu0 %v145
        %183 = vmatmul.f32.gmra.mxu0 %v156
        %v184 = vpop.f32.mrf.mxu0
        %v185 = vadd.f32 0.0, %v184
        %186 = vmatmul.f32.gmra.mxu0 %v159
        %v187 = vpop.f32.mrf.mxu0
        %v188 = vadd.f32 0.0, %v187
        %189 = vmatmul.f32.gmra.mxu0 %v162
        %v190 = vpop.f32.mrf.mxu0
        %v191 = vadd.f32 0.0, %v190
        %192 = vmatmul.f32.gmra.mxu0 %v165
        %v193 = vpop.f32.mrf.mxu0
        %v194 = vadd.f32 0.0, %v193
        %195 = vdwg.mxu0
        %vm196 = vcmask 64512
        %197 = vst.msk [vmem:[%s137] sm:$0xff] %vm196, %v185
        %198 = vst.msk [vmem:[%s137 + $0x20] sm:$0xff] %vm196, %v188
        %199 = vst.msk [vmem:[%s137 + $0x40] sm:$0xff] %vm196, %v191
        %200 = vst.msk [vmem:[%s137 + $0x60] sm:$0xff] %vm196, %v194
        %205 = vrot.lane.b32.xlu0 %v185, 120
        %v206 = vpop.permute.xlu0 %205
        %207 = vrot.lane.b32.xlu0 %v188, 120
        %v208 = vpop.permute.xlu0 %207
        %209 = vrot.lane.b32.xlu0 %v191, 120
        %v210 = vpop.permute.xlu0 %209
        %211 = vrot.lane.b32.xlu0 %v194, 120
        %v212 = vpop.permute.xlu0 %211
        %s217 = scalar_lea.vmem %s137, 8 [#allocation2]
        %218 = vst.msk [vmem:[%s217] sm:$0xff] %vm196, %v206
        %219 = vst.msk [vmem:[%s217 + $0x20] sm:$0xff] %vm196, %v208
        %220 = vst.msk [vmem:[%s217 + $0x40] sm:$0xff] %vm196, %v210
        %221 = vst.msk [vmem:[%s217 + $0x60] sm:$0xff] %vm196, %v212
        %s222 = scalar_lea.vmem %s142, 1
        %v223 = vld [vmem:[%s222] ss:$2 sm:$0xff]
        %s224 = scalar_lea.vmem %s142, 17
        %v225 = vld [vmem:[%s224] ss:$2 sm:$0xff]
        %s226 = scalar_lea.vmem %s142, 33
        %v227 = vld [vmem:[%s226] ss:$2 sm:$0xff]
        %s228 = scalar_lea.vmem %s142, 49
        %v229 = vld [vmem:[%s228] ss:$2 sm:$0xff]
        %v231 = vsel %vm154, %v223, 0
        %v234 = vsel %vm154, %v225, 0
        %v237 = vsel %vm154, %v227, 0
        %v240 = vsel %vm154, %v229, 0
        %242 = vmatpush.msra.mxu0 0.0
        %243 = vmatpush.msra.mxu0 0.0
        %244 = vmatpush.msra.mxu0 0.0
        %245 = vmatpush.msra.mxu0 0.0
        %246 = vmatpush.msra.mxu0 0.0
        %247 = vmatpush.msra.mxu0 0.0
        %248 = vmatpush.msra.mxu0 0.0
        %249 = vmatpush.msra.mxu0 0.0
        %250 = vmatpush.msra.mxu0 0.0
        %251 = vmatpush.msra.mxu0 0.0
        %252 = vmatpush.msra.mxu0 0.0
        %253 = vmatpush.msra.mxu0 0.0
        %254 = vmatpush.msra.mxu0 0.0
        %255 = vmatpush.msra.mxu0 0.0
        %256 = vmatpush.msra.mxu0 %v146
        %257 = vmatpush.msra.mxu0 %v145
        %258 = vmatmul.f32.gmra.mxu0 %v231
        %v259 = vpop.f32.mrf.mxu0
        %v260 = vadd.f32 0.0, %v259
        %261 = vmatmul.f32.gmra.mxu0 %v234
        %v262 = vpop.f32.mrf.mxu0
        %v263 = vadd.f32 0.0, %v262
        %264 = vmatmul.f32.gmra.mxu0 %v237
        %v265 = vpop.f32.mrf.mxu0
        %v266 = vadd.f32 0.0, %v265
        %267 = vmatmul.f32.gmra.mxu0 %v240
        %v268 = vpop.f32.mrf.mxu0
        %v269 = vadd.f32 0.0, %v268
        %270 = vdwg.mxu0
        %s271 = scalar_lea.vmem %s137, 16 [#allocation2]
        %272 = vst.msk [vmem:[%s271] sm:$0xff] %vm196, %v260
        %273 = vst.msk [vmem:[%s271 + $0x20] sm:$0xff] %vm196, %v263
        %274 = vst.msk [vmem:[%s271 + $0x40] sm:$0xff] %vm196, %v266
        %275 = vst.msk [vmem:[%s271 + $0x60] sm:$0xff] %vm196, %v269
        %280 = vrot.lane.b32.xlu0 %v260, 120
        %v281 = vpop.permute.xlu0 %280
        %282 = vrot.lane.b32.xlu0 %v263, 120
        %v283 = vpop.permute.xlu0 %282
        %284 = vrot.lane.b32.xlu0 %v266, 120
        %v285 = vpop.permute.xlu0 %284
        %286 = vrot.lane.b32.xlu0 %v269, 120
        %v287 = vpop.permute.xlu0 %286
        %s292 = scalar_lea.vmem %s137, 24 [#allocation2]
        %293 = vst.msk [vmem:[%s292] sm:$0xff] %vm196, %v281
        %294 = vst.msk [vmem:[%s292 + $0x20] sm:$0xff] %vm196, %v283
        %295 = vst.msk [vmem:[%s292 + $0x40] sm:$0xff] %vm196, %v285
        %296 = vst.msk [vmem:[%s292 + $0x60] sm:$0xff] %vm196, %v287
        %s297 = sand.u32 %s71, 1
        %s298 = scalar_lea.sflag [#allocation3], %s297
        %s299 = sand.u32 %s71, 1
        %s300 = smul.addr %s299, 128
        %s301 = scalar_lea.vmem [#allocation2], %s300
        // Predicated region
        $region29: #{tpu_custom_call.1} parent=27 // pred_check
          %p302 = pneg %p81
        $region30: #{tpu_custom_call.1} parent=27 // pred_check_branch
          %304 = sbr.rel (%p302) target = $region32
        $region31: #{tpu_custom_call.1} parent=27 // pred_region
          %s305 = smul.u32 4, %s16
          %307 = vsyncadd %s298, 0
          %s308 = smul.addr %s305, 4
          %s309 = smul.addr %s308, 8
          %s310 = scalar_lea.hbm %s2, %s309
          %s311 = sshll.u32 %s301, 4
          %s312 = int_to_ptr.vmem [resolvable:$true] %s311
          %s313 = sshll.u32 %s310, 4
          %s314 = int_to_ptr.hbm [resolvable:$true] %s313
          %319 = dma.vmem_to_hbm [thread:$0]  %s312, 2048, %s314, %s298, 128, 128, 8
        $region32: #{tpu_custom_call.1} parent=27 // pred_fallthru
          _
      $region28: #{tpu_custom_call.1} parent=5 // pred_fallthru
        _
      %p320 = scmp.le.s32.totalorder 2, %s11
      // Predicated region
      $region33: #{tpu_custom_call.1} parent=5 // pred_check
        %p321 = pneg %p320
      $region34: #{tpu_custom_call.1} parent=5 // pred_check_branch
        %323 = sbr.rel (%p321) target = $region36
      $region35: #{tpu_custom_call.1} parent=5 // pred_region
        %s324 = ssub.s32 %s11, 2
        // Predicated region
        $region37: #{tpu_custom_call.1} parent=35 // pred_check
          %p325 = pneg %p87
        $region38: #{tpu_custom_call.1} parent=35 // pred_check_branch
          %327 = sbr.rel (%p325) target = $region40
        $region39: #{tpu_custom_call.1} parent=35 // pred_region
          %s328 = sand.u32 %s72, 1
          %s329 = scalar_lea.sflag [#allocation3], %s328
          %s330 = sand.u32 %s72, 1
          %s331 = smul.addr %s330, 128
          %s332 = scalar_lea.vmem [#allocation2], %s331
          %334 = dma.done %s329, 2048
        $region40: #{tpu_custom_call.1} parent=35 // pred_fallthru
          _
      $region36: #{tpu_custom_call.1} parent=5 // pred_fallthru
        _
    $region6: #{tpu_custom_call.1} parent=1 // loop_footer
      %s15 = sadd.s32 1, %s11
    $region7: #{tpu_custom_call.1} parent=1 // loop_footer_branch
      %10 = sbr.rel target = $region3
    $region8: #{tpu_custom_call.1} parent=1 // loop_exit
      _
    %335 = vsyncpa [#allocation3], 1
    %s336 = scalar_lea.sflag [#allocation3], 1
    %337 = vsyncpa %s336, 1

</llo_original>
